<compile_context>
chip_gen: v7x
topology: tpu7x:2x2x1
jax: 0.10.0
libtpu: 0.0.40
codegen_flags: <defaults>
</compile_context>

<pallas_src>
import functools

import jax
import jax.numpy as jnp
import numpy as np
from jax.experimental import pallas as pl
from jax.experimental.pallas import tpu as pltpu

N_JOINTS = 23


def _round_up(x, m):
    return (x + m - 1) // m * m


def _device_kind():
    try:
        return jax.devices()[0].device_kind.lower()
    except Exception:
        return ""


def _is_v7x(kind=None):
    kind = _device_kind() if kind is None else kind
    return ("v7" in kind) or ("7x" in kind)


def _is_v5e(kind=None):
    kind = _device_kind() if kind is None else kind
    return ("v5 lite" in kind) or ("v5e" in kind) or ("v5litepod" in kind)


def _pose_disc_kernel(x_ref, w_ref, b_ref, h_ref, o_ref, *, hj, nj):
    # x:   (TB, J*C0)        one batch tile, joints/channels flattened
    # w:   (J*C0, HJ + J)    fused folded weights (VMEM resident, block (0,0))
    # b:   (1, HJ + J)       fused bias (f32)
    # One fused MXU matmul covers both the conv stack and the FC heads:
    #   columns [0:hj]      -> internal activations in NCHW [h][j] order
    #   columns [hj:hj+nj]  -> per-joint discriminator scores
    res = jnp.dot(x_ref[...], w_ref[...], preferred_element_type=jnp.float32)
    res = res + b_ref[...]
    h_ref[...] = res[:, :hj].astype(h_ref.dtype)        # lane-dense 736-wide store
    o_ref[...] = res[:, hj:hj + nj].astype(o_ref.dtype)


def fold_params(params, *, compute_dtype=jnp.float32):
    """Fold the 1x1-conv stack + 23 FC heads into one fused matmul weight.

    params = (conv_ws, conv_bs, fcw, fcb) with conv_ws[i]: (c_{i+1}, c_i).
    Returns (W_all: (J*C0, H2*J + J) in compute_dtype, b_all: (1, H2*J + J) f32).
    """
    conv_ws, conv_bs, fcw, fcb = params
    hi = jax.lax.Precision.HIGHEST

    # Fold the conv stack (no activations in between -> exact composition).
    Wc = conv_ws[0]
    bc = conv_bs[0]
    for w, b in zip(conv_ws[1:], conv_bs[1:]):
        Wc = jnp.matmul(w, Wc, precision=hi)
        bc = jnp.matmul(w, bc, precision=hi) + b

    H2, C0 = Wc.shape
    J = fcw.shape[0]
    eye = jnp.eye(J, dtype=Wc.dtype)

    # Conv block: W_conv[j*C0 + c, h*J + j'] = Wc[h, c] * (j == j')
    W_conv = (Wc.T[None, :, :, None] * eye[:, None, None, :]).reshape(J * C0, H2 * J)
    b_conv = jnp.broadcast_to(bc[:, None], (H2, J)).reshape(H2 * J)

    # Per-joint heads folded through the conv stack.
    v = jnp.matmul(fcw, Wc, precision=hi)                       # (J, C0)
    W_head = (v[:, :, None] * eye[:, None, :]).reshape(J * C0, J)
    b_head = fcb + jnp.matmul(fcw, bc, precision=hi)            # (J,)

    W_all = jnp.concatenate([W_conv, W_head], axis=1).astype(compute_dtype)
    b_all = jnp.concatenate([b_conv, b_head], axis=0).reshape(1, -1).astype(jnp.float32)
    return W_all, b_all


def pose_discriminator_forward(inputs, folded, *, block_b=2048, n_batch_splits=None):
    """inputs: (B, 23, C0).  Returns (o: (B, 23) f32, internal: (B, H2, 1, 23) f32)."""
    B, J, C0 = inputs.shape
    assert J == N_JOINTS
    W_all, b_all = folded
    JC = J * C0
    NW = W_all.shape[1]
    HJ = NW - J
    H2 = HJ // J
    assert W_all.shape[0] == JC and H2 * J == HJ

    cdt = W_all.dtype
    # bf16 operands pack 16 rows per sublane group; keep the batch tile aligned.
    sub = 16 if cdt == jnp.bfloat16 else 8

    # On v7x the "parallel" grid axis is sharded across 2 TensorCores: give the
    # grid >= n_batch_splits steps so the second core is not idle. v5e/v6e: 1 TC.
    if n_batch_splits is None:
        n_batch_splits = 4 if _is_v7x() else 1

    B_pad = max(sub, _round_up(B, sub))
    tb = min(block_b, max(sub, _round_up(pl.cdiv(B_pad, n_batch_splits), sub)))
    P = _round_up(B_pad, tb)

    x2d = inputs.reshape(B, JC).astype(cdt)      # free reshape, row layout [j][c]
    if P != B:
        x2d = jnp.pad(x2d, ((0, P - B), (0, 0)))

    grid = (P // tb,)

    flops = 2 * P * JC * NW
    bytes_accessed = (P * JC * x2d.dtype.itemsize
                      + JC * NW * W_all.dtype.itemsize
                      + NW * 4
                      + P * (HJ + J) * 4)

    kernel = functools.partial(_pose_disc_kernel, hj=HJ, nj=J)

    h2d, o = pl.pallas_call(
        kernel,
        out_shape=(
            jax.ShapeDtypeStruct((P, HJ), jnp.float32),   # internal, [h][j] cols
            jax.ShapeDtypeStruct((P, J), jnp.float32),    # per-joint scores
        ),
        grid=grid,
        in_specs=[
            pl.BlockSpec((tb, JC), lambda i: (i, 0)),     # x tiled over batch
            pl.BlockSpec((JC, NW), lambda i: (0, 0)),     # fused weights resident
            pl.BlockSpec((1, NW), lambda i: (0, 0)),      # fused bias resident
        ],
        out_specs=(
            pl.BlockSpec((tb, HJ), lambda i: (i, 0)),
            pl.BlockSpec((tb, J), lambda i: (i, 0)),
        ),
        compiler_params=pltpu.CompilerParams(
            dimension_semantics=("parallel",),
            vmem_limit_bytes=48 * 1024 * 1024,
        ),
        cost_estimate=pl.CostEstimate(
            flops=flops, transcendentals=0, bytes_accessed=bytes_accessed),
    )(x2d, W_all, b_all)

    if P != B:
        # NOTE: this slice re-reads/writes the dominant output; it only triggers
        # when B is not sublane-aligned -- keep B a multiple of 8 (16 for bf16)
        # upstream to skip it entirely.
        h2d = h2d[:B]
        o = o[:B]

    # Columns are already ordered [h][j] (NCHW), so this reshape is free.
    internal = h2d.reshape(B, H2, 1, J)
    return o, internal


def init_params(key, channels):
    """channels e.g. [9, 32, 32, 1]; builds conv_0..conv_{l-3} and 23 fc heads."""
    assert channels[-1] == 1, "the neuron count of the last layer must be 1"
    l = len(channels)
    n_conv = l - 2
    keys = jax.random.split(key, 2 * n_conv + 2)
    ki = 0
    conv_ws, conv_bs = [], []
    for idx in range(n_conv):
        cin, cout = channels[idx], channels[idx + 1]
        conv_ws.append(jax.random.normal(keys[ki], (cout, cin), jnp.float32) * 0.1)
        ki += 1
        conv_bs.append(jax.random.normal(keys[ki], (cout,), jnp.float32) * 0.1)
        ki += 1
    hid = channels[l - 2]
    fcw = jax.random.normal(keys[ki], (N_JOINTS, hid), jnp.float32) * 0.1
    fcb = jax.random.normal(keys[ki + 1], (N_JOINTS,), jnp.float32) * 0.1
    return conv_ws, conv_bs, fcw, fcb


def _reference_numpy(inputs, params):
    """Unfused float64 reference matching the PyTorch op ordering."""
    conv_ws, conv_bs, fcw, fcb = params
    h = np.asarray(inputs, np.float64)                     # (B, J, C0)
    for w, b in zip(conv_ws, conv_bs):
        w64 = np.asarray(w, np.float64)
        b64 = np.asarray(b, np.float64)
        h = np.einsum('bjc,hc->bjh', h, w64) + b64
    fcw64 = np.asarray(fcw, np.float64)
    fcb64 = np.asarray(fcb, np.float64)
    o = np.einsum('bjh,jh->bj', h, fcw64) + fcb64
    internal = np.transpose(h, (0, 2, 1))[:, :, None, :]   # (B, H2, 1, J)
    return o, internal


if __name__ == "__main__":
    key = jax.random.PRNGKey(0)
    k_in, k_par = jax.random.split(key)

    channels = [9, 32, 32, 1]      # channels[-1] must be 1
    B = 2
    x = jax.random.normal(k_in, (B, N_JOINTS, channels[0]), jnp.float32)
    params = init_params(k_par, channels)

    # v5e is MXU-pass-bound with f32 operands on the 23x-inflated block-diagonal
    # weights; bf16 operands (with f32 accumulation) flip it back to HBM-bound.
    compute_dtype = jnp.bfloat16 if _is_v5e() else jnp.float32
    folded = fold_params(params, compute_dtype=compute_dtype)

    fwd = jax.jit(pose_discriminator_forward)
    o, internal = fwd(x, folded)
    o = jax.block_until_ready(o)
    internal = jax.block_until_ready(internal)

    H2 = channels[-2]
    assert o.shape == (B, N_JOINTS)
    assert internal.shape == (B, H2, 1, N_JOINTS)

    o_ref, internal_ref = _reference_numpy(x, params)
    if compute_dtype == jnp.bfloat16:
        rtol, atol = 2e-2, 2e-3
    else:
        rtol, atol = 1e-3, 1e-4
    np.testing.assert_allclose(np.asarray(o), o_ref, rtol=rtol, atol=atol)
    np.testing.assert_allclose(np.asarray(internal), internal_ref, rtol=rtol, atol=atol)
    print("KERNEL_OK")
</pallas_src>

<mosaic_0001>
module attributes {stable_mosaic.version = 11 : i64} {
  func.func @_pose_disc_kernel(%arg0: i32, %arg1: memref<8x207xf32, #tpu.memory_space<vmem>>, %arg2: memref<207x759xf32, #tpu.memory_space<vmem>>, %arg3: memref<1x759xf32, #tpu.memory_space<vmem>>, %arg4: memref<8x736xf32, #tpu.memory_space<vmem>>, %arg5: memref<8x23xf32, #tpu.memory_space<vmem>>) attributes {dimension_semantics = [#tpu.dimension_semantics<parallel>], iteration_bounds = array<i64: 1>, scalar_prefetch = 0 : i64, scratch_operands = 0 : i64, tpu.core_type = #tpu.core_type<tc>, window_params = [{transform_indices = @transform_0, window_bounds = array<i64: 8, 207>}, {pipeline_mode = #tpu.pipeline_mode<synchronous>, transform_indices = @transform_1, window_bounds = array<i64: 207, 759>}, {pipeline_mode = #tpu.pipeline_mode<synchronous>, transform_indices = @transform_2, window_bounds = array<i64: 1, 759>}, {transform_indices = @transform_3, window_bounds = array<i64: 8, 736>}, {transform_indices = @transform_4, window_bounds = array<i64: 8, 23>}]} {
    %c0 = arith.constant 0 : index
    %c0_0 = arith.constant 0 : index
    %0 = vector.load %arg1[%c0, %c0_0] : memref<8x207xf32, #tpu.memory_space<vmem>>, vector<8x207xf32>
    %c0_1 = arith.constant 0 : index
    %c0_2 = arith.constant 0 : index
    %1 = vector.load %arg2[%c0_1, %c0_2] : memref<207x759xf32, #tpu.memory_space<vmem>>, vector<207x759xf32>
    %cst = arith.constant dense<0.000000e+00> : vector<8x759xf32>
    %2 = tpu.matmul %0, %1, %cst {dimension_numbers = #tpu.dot_dimension_numbers<[1], [0], [0], [1], [0, 0, 1, 1], [], []>} : vector<8x207xf32>, vector<207x759xf32>, vector<8x759xf32> -> vector<8x759xf32>
    %c0_3 = arith.constant 0 : index
    %c0_4 = arith.constant 0 : index
    %3 = vector.load %arg3[%c0_3, %c0_4] : memref<1x759xf32, #tpu.memory_space<vmem>>, vector<1x759xf32>
    %4 = vector.broadcast %3 : vector<1x759xf32> to vector<8x759xf32>
    %5 = arith.addf %2, %4 : vector<8x759xf32>
    %6 = vector.extract_strided_slice %5 {offsets = [0, 0], sizes = [8, 736], strides = [1, 1]} : vector<8x759xf32> to vector<8x736xf32>
    %c0_5 = arith.constant 0 : index
    %c0_6 = arith.constant 0 : index
    %7 = vector.load %arg4[%c0_5, %c0_6] : memref<8x736xf32, #tpu.memory_space<vmem>>, vector<8x736xf32>
    tpu.vector_store %arg4[%c0_5, %c0_6], %6 {strides = array<i32>} : memref<8x736xf32, #tpu.memory_space<vmem>>, vector<8x736xf32>,
    %8 = vector.extract_strided_slice %5 {offsets = [0, 736], sizes = [8, 23], strides = [1, 1]} : vector<8x759xf32> to vector<8x23xf32>
    %c0_7 = arith.constant 0 : index
    %c0_8 = arith.constant 0 : index
    %9 = vector.load %arg5[%c0_7, %c0_8] : memref<8x23xf32, #tpu.memory_space<vmem>>, vector<8x23xf32>
    tpu.vector_store %arg5[%c0_7, %c0_8], %8 {strides = array<i32>} : memref<8x23xf32, #tpu.memory_space<vmem>>, vector<8x23xf32>,
    return
  }
  func.func @transform_0(%arg0: i32) -> (i32, i32) {
    %c0_i32 = arith.constant 0 : i32
    %c0_i32_0 = arith.constant 0 : i32
    return %arg0, %c0_i32 : i32, i32
  }
  func.func @transform_1(%arg0: i32) -> (i32, i32) {
    %c0_i32 = arith.constant 0 : i32
    %c0_i32_0 = arith.constant 0 : i32
    %c0_i32_1 = arith.constant 0 : i32
    return %c0_i32, %c0_i32_0 : i32, i32
  }
  func.func @transform_2(%arg0: i32) -> (i32, i32) {
    %c0_i32 = arith.constant 0 : i32
    %c0_i32_0 = arith.constant 0 : i32
    %c0_i32_1 = arith.constant 0 : i32
    return %c0_i32, %c0_i32_0 : i32, i32
  }
  func.func @transform_3(%arg0: i32) -> (i32, i32) {
    %c0_i32 = arith.constant 0 : i32
    %c0_i32_0 = arith.constant 0 : i32
    return %arg0, %c0_i32 : i32, i32
  }
  func.func @transform_4(%arg0: i32) -> (i32, i32) {
    %c0_i32 = arith.constant 0 : i32
    %c0_i32_0 = arith.constant 0 : i32
    return %arg0, %c0_i32 : i32, i32
  }
}

</mosaic_0001>

<llo_original>
// kernel: pose_discriminator_forward.1
$region0: #{pose_discriminator_forward.1}
  #allocation0 [shape = 'u32[]', space=smem, size = 0x4, offset = 0x4, fixed_abs, tag = 'smem constant byte address 0x4 - core index']
  #allocation1 [shape = 'u32[144,128]{1,0:T(1,128)}', space=vmem, size = 0x12000, scoped, tag = 'internal scratch']
  %s0 = inlined_call_operand.vmem [shape: f32[8,207], index: 0, kind: input, shape index: {}]
  %s1 = inlined_call_operand.hbm [shape: f32[207,759], index: 1, kind: input, shape index: {}]
  %s2 = inlined_call_operand.vmem [shape: f32[1,759], index: 2, kind: input, shape index: {}]
  %s3 = inlined_call_operand.vmem [shape: f32[8,736], index: 3, kind: output, shape index: {0}]
  %s4 = inlined_call_operand.vmem [shape: f32[8,23], index: 4, kind: output, shape index: {1}]
  %5 = xla_tuple %s3, %s4
  %s6 = sld [smem:[#allocation0]]
  $region34: #{pose_discriminator_forward.1} parent=0
    _
  %s8 = ssub.s32 1, %s6
  %s9 = scalar_select 0, %s8, %s6
  $region1: #{pose_discriminator_forward.1} parent=0
    #allocation2 [shape = 'u8[638976]{0}', space=vmem, size = 0x9c000, scoped, tag = 'input window, operand 1, single buffered']
    #allocation3 [shape = 's32[1]{0}', space=sflag, size = 0x4, scoped, tag = 'scoped memory for pose_discriminator_forward.1']
    %10 = vsyncpa [#allocation3], 0
    // Predicated region
    $region2: #{pose_discriminator_forward.1} parent=1 // pred_check
      _
    $region3: #{pose_discriminator_forward.1} parent=1 // pred_check_branch
      %12 = sbr.rel (0) target = $region5
    $region4: #{pose_discriminator_forward.1} parent=1 // pred_region
      _
    $region5: #{pose_discriminator_forward.1} parent=1 // pred_fallthru
      _
    // Predicated region
    $region6: #{pose_discriminator_forward.1} parent=1 // pred_check
      _
    $region7: #{pose_discriminator_forward.1} parent=1 // pred_check_branch
      %14 = sbr.rel (0) target = $region9
    $region8: #{pose_discriminator_forward.1} parent=1 // pred_region
      %s16 = ssub.s32 19968, 19968
      %17 = vsyncadd [#allocation3], %s16
      %s18 = sshll.u32 [#allocation2], 4
      %s19 = int_to_ptr.vmem [resolvable:$true] %s18
      %24 = dma.hbm_to_vmem [thread:$0]  %s1, 19968, %s19, [#allocation3], 768, 768, 48
    $region9: #{pose_discriminator_forward.1} parent=1 // pred_fallthru
      _
    // Predicated region
    $region10: #{pose_discriminator_forward.1} parent=1 // pred_check
      _
    $region11: #{pose_discriminator_forward.1} parent=1 // pred_check_branch
      %26 = sbr.rel (0) target = $region13
    $region12: #{pose_discriminator_forward.1} parent=1 // pred_region
      _
    $region13: #{pose_discriminator_forward.1} parent=1 // pred_fallthru
      _
    // Predicated region
    $region14: #{pose_discriminator_forward.1} parent=1 // pred_check
      _
    $region15: #{pose_discriminator_forward.1} parent=1 // pred_check_branch
      %28 = sbr.rel (0) target = $region17
    $region16: #{pose_discriminator_forward.1} parent=1 // pred_region
      %29 = dma.done [#allocation3], 19968
    $region17: #{pose_discriminator_forward.1} parent=1 // pred_fallthru
      _
    %v30 = vld [vmem:[%s0] sm:$0xff]
    %v31 = vld [vmem:[%s0 + $0x8] sm:$0xff]
    %v32 = vld [vmem:[#allocation2] sm:$0xff]
    %v33 = vld [vmem:[#allocation2 + $0x8] sm:$0xff]
    %v34 = vld [vmem:[#allocation2 + $0x10] sm:$0xff]
    %v35 = vld [vmem:[#allocation2 + $0x18] sm:$0xff]
    %v36 = vld [vmem:[#allocation2 + $0x20] sm:$0xff]
    %v37 = vld [vmem:[#allocation2 + $0x28] sm:$0xff]
    %v38 = vld [vmem:[#allocation2 + $0x30] sm:$0xff]
    %v39 = vld [vmem:[#allocation2 + $0x38] sm:$0xff]
    %v40 = vld [vmem:[#allocation2 + $0x40] sm:$0xff]
    %v41 = vld [vmem:[#allocation2 + $0x48] sm:$0xff]
    %v42 = vld [vmem:[#allocation2 + $0x50] sm:$0xff]
    %v43 = vld [vmem:[#allocation2 + $0x58] sm:$0xff]
    %v44 = vld [vmem:[#allocation2 + $0x60] sm:$0xff]
    %v45 = vld [vmem:[#allocation2 + $0x68] sm:$0xff]
    %v46 = vld [vmem:[#allocation2 + $0x70] sm:$0xff]
    %v47 = vld [vmem:[#allocation2 + $0x78] sm:$0xff]
    %v48 = vld [vmem:[#allocation2 + $0x80] sm:$0xff]
    %v49 = vld [vmem:[#allocation2 + $0x88] sm:$0xff]
    %v50 = vld [vmem:[#allocation2 + $0x90] sm:$0xff]
    %v51 = vld [vmem:[#allocation2 + $0x98] sm:$0xff]
    %v52 = vld [vmem:[#allocation2 + $0xa0] sm:$0xff]
    %v53 = vld [vmem:[#allocation2 + $0xa8] sm:$0xff]
    %v54 = vld [vmem:[#allocation2 + $0xb0] sm:$0xff]
    %v55 = vld [vmem:[#allocation2 + $0xb8] sm:$0xff]
    %v56 = vld [vmem:[#allocation2 + $0xc0] sm:$0xff]
    %v57 = vld [vmem:[#allocation2 + $0xc8] sm:$0xff]
    %v58 = vld [vmem:[#allocation2 + $0xd0] sm:$0xff]
    %v59 = vld [vmem:[#allocation2 + $0xd8] sm:$0xff]
    %v60 = vld [vmem:[#allocation2 + $0xe0] sm:$0xff]
    %v61 = vld [vmem:[#allocation2 + $0xe8] sm:$0xff]
    %v62 = vld [vmem:[#allocation2 + $0xf0] sm:$0xff]
    %v63 = vld [vmem:[#allocation2 + $0xf8] sm:$0xff]
    %v64 = vld [vmem:[#allocation2 + $0x100] sm:$0xff]
    %v65 = vld [vmem:[#allocation2 + $0x108] sm:$0xff]
    %v66 = vld [vmem:[#allocation2 + $0x110] sm:$0xff]
    %v67 = vld [vmem:[#allocation2 + $0x118] sm:$0xff]
    %v68 = vld [vmem:[#allocation2 + $0x120] sm:$0xff]
    %v69 = vld [vmem:[#allocation2 + $0x128] sm:$0xff]
    %v70 = vld [vmem:[#allocation2 + $0x130] sm:$0xff]
    %v71 = vld [vmem:[#allocation2 + $0x138] sm:$0xff]
    %v72 = vld [vmem:[#allocation2 + $0x140] sm:$0xff]
    %v73 = vld [vmem:[#allocation2 + $0x148] sm:$0xff]
    %v74 = vld [vmem:[#allocation2 + $0x150] sm:$0xff]
    %v75 = vld [vmem:[#allocation2 + $0x158] sm:$0xff]
    %v76 = vld [vmem:[#allocation2 + $0x160] sm:$0xff]
    %v77 = vld [vmem:[#allocation2 + $0x168] sm:$0xff]
    %v78 = vld [vmem:[#allocation2 + $0x170] sm:$0xff]
    %v79 = vld [vmem:[#allocation2 + $0x178] sm:$0xff]
    %v80 = vld [vmem:[#allocation2 + $0x180] sm:$0xff]
    %v81 = vld [vmem:[#allocation2 + $0x188] sm:$0xff]
    %v82 = vld [vmem:[#allocation2 + $0x190] sm:$0xff]
    %v83 = vld [vmem:[#allocation2 + $0x198] sm:$0xff]
    %v84 = vld [vmem:[#allocation2 + $0x1a0] sm:$0xff]
    %v85 = vld [vmem:[#allocation2 + $0x1a8] sm:$0xff]
    %v86 = vld [vmem:[#allocation2 + $0x1b0] sm:$0xff]
    %v87 = vld [vmem:[#allocation2 + $0x1b8] sm:$0xff]
    %v88 = vld [vmem:[#allocation2 + $0x1c0] sm:$0xff]
    %v89 = vld [vmem:[#allocation2 + $0x1c8] sm:$0xff]
    %v90 = vld [vmem:[#allocation2 + $0x1d0] sm:$0xff]
    %v91 = vld [vmem:[#allocation2 + $0x1d8] sm:$0xff]
    %v92 = vld [vmem:[#allocation2 + $0x1e0] sm:$0xff]
    %v93 = vld [vmem:[#allocation2 + $0x1e8] sm:$0xff]
    %v94 = vld [vmem:[#allocation2 + $0x1f0] sm:$0xff]
    %v95 = vld [vmem:[#allocation2 + $0x1f8] sm:$0xff]
    %v96 = vld [vmem:[#allocation2 + $0x200] sm:$0xff]
    %v97 = vld [vmem:[#allocation2 + $0x208] sm:$0xff]
    %v98 = vld [vmem:[#allocation2 + $0x210] sm:$0xff]
    %v99 = vld [vmem:[#allocation2 + $0x218] sm:$0xff]
    %v100 = vld [vmem:[#allocation2 + $0x220] sm:$0xff]
    %v101 = vld [vmem:[#allocation2 + $0x228] sm:$0xff]
    %v102 = vld [vmem:[#allocation2 + $0x230] sm:$0xff]
    %v103 = vld [vmem:[#allocation2 + $0x238] sm:$0xff]
    %v104 = vld [vmem:[#allocation2 + $0x240] sm:$0xff]
    %v105 = vld [vmem:[#allocation2 + $0x248] sm:$0xff]
    %v106 = vld [vmem:[#allocation2 + $0x250] sm:$0xff]
    %v107 = vld [vmem:[#allocation2 + $0x258] sm:$0xff]
    %v108 = vld [vmem:[#allocation2 + $0x260] sm:$0xff]
    %v109 = vld [vmem:[#allocation2 + $0x268] sm:$0xff]
    %v110 = vld [vmem:[#allocation2 + $0x270] sm:$0xff]
    %v111 = vld [vmem:[#allocation2 + $0x278] sm:$0xff]
    %v112 = vld [vmem:[#allocation2 + $0x280] sm:$0xff]
    %v113 = vld [vmem:[#allocation2 + $0x288] sm:$0xff]
    %v114 = vld [vmem:[#allocation2 + $0x290] sm:$0xff]
    %v115 = vld [vmem:[#allocation2 + $0x298] sm:$0xff]
    %v116 = vld [vmem:[#allocation2 + $0x2a0] sm:$0xff]
    %v117 = vld [vmem:[#allocation2 + $0x2a8] sm:$0xff]
    %v118 = vld [vmem:[#allocation2 + $0x2b0] sm:$0xff]
    %v119 = vld [vmem:[#allocation2 + $0x2b8] sm:$0xff]
    %v120 = vld [vmem:[#allocation2 + $0x2c0] sm:$0xff]
    %v121 = vld [vmem:[#allocation2 + $0x2c8] sm:$0xff]
    %v122 = vld [vmem:[#allocation2 + $0x2d0] sm:$0xff]
    %v123 = vld [vmem:[#allocation2 + $0x2d8] sm:$0xff]
    %v124 = vld [vmem:[#allocation2 + $0x2e0] sm:$0xff]
    %v125 = vld [vmem:[#allocation2 + $0x2e8] sm:$0xff]
    %v126 = vld [vmem:[#allocation2 + $0x2f0] sm:$0xff]
    %v127 = vld [vmem:[#allocation2 + $0x2f8] sm:$0xff]
    %v128 = vld [vmem:[#allocation2 + $0x300] sm:$0xff]
    %v129 = vld [vmem:[#allocation2 + $0x308] sm:$0xff]
    %v130 = vld [vmem:[#allocation2 + $0x310] sm:$0xff]
    %v131 = vld [vmem:[#allocation2 + $0x318] sm:$0xff]
    %v132 = vld [vmem:[#allocation2 + $0x320] sm:$0xff]
    %v133 = vld [vmem:[#allocation2 + $0x328] sm:$0xff]
    %v134 = vld [vmem:[#allocation2 + $0x330] sm:$0xff]
    %v135 = vld [vmem:[#allocation2 + $0x338] sm:$0xff]
    %v136 = vld [vmem:[#allocation2 + $0x340] sm:$0xff]
    %v137 = vld [vmem:[#allocation2 + $0x348] sm:$0xff]
    %v138 = vld [vmem:[#allocation2 + $0x350] sm:$0xff]
    %v139 = vld [vmem:[#allocation2 + $0x358] sm:$0xff]
    %v140 = vld [vmem:[#allocation2 + $0x360] sm:$0xff]
    %v141 = vld [vmem:[#allocation2 + $0x368] sm:$0xff]
    %v142 = vld [vmem:[#allocation2 + $0x370] sm:$0xff]
    %v143 = vld [vmem:[#allocation2 + $0x378] sm:$0xff]
    %v144 = vld [vmem:[#allocation2 + $0x380] sm:$0xff]
    %v145 = vld [vmem:[#allocation2 + $0x388] sm:$0xff]
    %v146 = vld [vmem:[#allocation2 + $0x390] sm:$0xff]
    %v147 = vld [vmem:[#allocation2 + $0x398] sm:$0xff]
    %v148 = vld [vmem:[#allocation2 + $0x3a0] sm:$0xff]
    %v149 = vld [vmem:[#allocation2 + $0x3a8] sm:$0xff]
    %v150 = vld [vmem:[#allocation2 + $0x3b0] sm:$0xff]
    %v151 = vld [vmem:[#allocation2 + $0x3b8] sm:$0xff]
    %v152 = vld [vmem:[#allocation2 + $0x3c0] sm:$0xff]
    %v153 = vld [vmem:[#allocation2 + $0x3c8] sm:$0xff]
    %v154 = vld [vmem:[#allocation2 + $0x3d0] sm:$0xff]
    %v155 = vld [vmem:[#allocation2 + $0x3d8] sm:$0xff]
    %v156 = vld [vmem:[#allocation2 + $0x3e0] sm:$0xff]
    %v157 = vld [vmem:[#allocation2 + $0x3e8] sm:$0xff]
    %v158 = vld [vmem:[#allocation2 + $0x3f0] sm:$0xff]
    %v159 = vld [vmem:[#allocation2 + $0x3f8] sm:$0xff]
    %v160 = vld [vmem:[#allocation2 + $0x400] sm:$0xff]
    %v161 = vld [vmem:[#allocation2 + $0x408] sm:$0xff]
    %v162 = vld [vmem:[#allocation2 + $0x410] sm:$0xff]
    %v163 = vld [vmem:[#allocation2 + $0x418] sm:$0xff]
    %v164 = vld [vmem:[#allocation2 + $0x420] sm:$0xff]
    %v165 = vld [vmem:[#allocation2 + $0x428] sm:$0xff]
    %v166 = vld [vmem:[#allocation2 + $0x430] sm:$0xff]
    %v167 = vld [vmem:[#allocation2 + $0x438] sm:$0xff]
    %v168 = vld [vmem:[#allocation2 + $0x440] sm:$0xff]
    %v169 = vld [vmem:[#allocation2 + $0x448] sm:$0xff]
    %v170 = vld [vmem:[#allocation2 + $0x450] sm:$0xff]
    %v171 = vld [vmem:[#allocation2 + $0x458] sm:$0xff]
    %v172 = vld [vmem:[#allocation2 + $0x460] sm:$0xff]
    %v173 = vld [vmem:[#allocation2 + $0x468] sm:$0xff]
    %v174 = vld [vmem:[#allocation2 + $0x470] sm:$0xff]
    %v175 = vld [vmem:[#allocation2 + $0x478] sm:$0xff]
    %v176 = vld [vmem:[#allocation2 + $0x480] sm:$0xff]
    %v177 = vld [vmem:[#allocation2 + $0x488] sm:$0xff]
    %v178 = vld [vmem:[#allocation2 + $0x490] sm:$0xff]
    %v179 = vld [vmem:[#allocation2 + $0x498] sm:$0xff]
    %v180 = vld [vmem:[#allocation2 + $0x4a0] sm:$0xff]
    %v181 = vld [vmem:[#allocation2 + $0x4a8] sm:$0xff]
    %v182 = vld [vmem:[#allocation2 + $0x4b0] sm:$0x7f]
    %v183 = vld [vmem:[#allocation2 + $0x4b8] sm:$0x7f]
    %v184 = vld [vmem:[#allocation2 + $0x4c0] sm:$0x7f]
    %v185 = vld [vmem:[#allocation2 + $0x4c8] sm:$0x7f]
    %v186 = vld [vmem:[#allocation2 + $0x4d0] sm:$0x7f]
    %v187 = vld [vmem:[#allocation2 + $0x4d8] sm:$0x7f]
    %v188 = vld [vmem:[%s2] sm:$0x3f]
    %v190 = vlaneseq
    %v191 = vshrl.u32 %v190, 7
    %v192 = vsub.s32 0, %v191
    %v193 = vrot.slane %v188, %v192
    %v194 = vlaneseq
    %v195 = vshrl.u32 %v194, 7
    %v196 = vsub.s32 1, %v195
    %v197 = vrot.slane %v188, %v196
    %v198 = vlaneseq
    %v199 = vshrl.u32 %v198, 7
    %v200 = vsub.s32 2, %v199
    %v201 = vrot.slane %v188, %v200
    %v202 = vlaneseq
    %v203 = vshrl.u32 %v202, 7
    %v204 = vsub.s32 3, %v203
    %v205 = vrot.slane %v188, %v204
    %v206 = vlaneseq
    %v207 = vshrl.u32 %v206, 7
    %v208 = vsub.s32 4, %v207
    %v209 = vrot.slane %v188, %v208
    %v210 = vlaneseq
    %v211 = vshrl.u32 %v210, 7
    %v212 = vsub.s32 5, %v211
    %v213 = vrot.slane %v188, %v212
    %vm220 = vcmask 646144
    %v222 = vsel %vm220, %v31, 0
    %vm224 = vcmask 1046528
    %v226 = vsel %vm224, %v182, 0
    %v229 = vsel %vm224, %v183, 0
    %v232 = vsel %vm224, %v184, 0
    %v235 = vsel %vm224, %v185, 0
    %v238 = vsel %vm224, %v186, 0
    %v241 = vsel %vm224, %v187, 0
    %243 = vmatprep.subr.mxu0 %v33
    %244 = vmatpush1.msra.mxu0 %v32
    %245 = vmatprep.subr.mxu0 %v39
    %246 = vmatpush1.msra.mxu0 %v38
    %247 = vmatprep.subr.mxu0 %v45
    %248 = vmatpush1.msra.mxu0 %v44
    %249 = vmatprep.subr.mxu0 %v51
    %250 = vmatpush1.msra.mxu0 %v50
    %251 = vmatprep.subr.mxu0 %v57
    %252 = vmatpush1.msra.mxu0 %v56
    %253 = vmatprep.subr.mxu0 %v63
    %254 = vmatpush1.msra.mxu0 %v62
    %255 = vmatprep.subr.mxu0 %v69
    %256 = vmatpush1.msra.mxu0 %v68
    %257 = vmatprep.subr.mxu0 %v75
    %258 = vmatpush1.msra.mxu0 %v74
    %259 = vmatprep.subr.mxu0 %v81
    %260 = vmatpush1.msra.mxu0 %v80
    %261 = vmatprep.subr.mxu0 %v87
    %262 = vmatpush1.msra.mxu0 %v86
    %263 = vmatprep.subr.mxu0 %v93
    %264 = vmatpush1.msra.mxu0 %v92
    %265 = vmatprep.subr.mxu0 %v99
    %266 = vmatpush1.msra.mxu0 %v98
    %267 = vmatprep.subr.mxu0 %v105
    %268 = vmatpush1.msra.mxu0 %v104
    %269 = vmatprep.subr.mxu0 %v111
    %270 = vmatpush1.msra.mxu0 %v110
    %271 = vmatprep.subr.mxu0 %v117
    %272 = vmatpush1.msra.mxu0 %v116
    %273 = vmatprep.subr.mxu0 %v123
    %274 = vmatpush1.msra.mxu0 %v122
    %275 = vmatprep.subr.mxu0 %v129
    %276 = vmatpush1.msra.mxu0 %v128
    %277 = vmatprep.subr.mxu0 %v135
    %278 = vmatpush1.msra.mxu0 %v134
    %279 = vmatprep.subr.mxu0 %v141
    %280 = vmatpush1.msra.mxu0 %v140
    %281 = vmatprep.subr.mxu0 %v147
    %282 = vmatpush1.msra.mxu0 %v146
    %283 = vmatprep.subr.mxu0 %v153
    %284 = vmatpush1.msra.mxu0 %v152
    %285 = vmatprep.subr.mxu0 %v159
    %286 = vmatpush1.msra.mxu0 %v158
    %287 = vmatprep.subr.mxu0 %v165
    %288 = vmatpush1.msra.mxu0 %v164
    %289 = vmatprep.subr.mxu0 %v171
    %290 = vmatpush1.msra.mxu0 %v170
    %291 = vmatprep.subr.mxu0 %v177
    %292 = vmatpush1.msra.mxu0 %v176
    %293 = vmatprep.subr.mxu0 %v229
    %294 = vmatpush1.msra.mxu0 %v226
    %295 = vmatprep.subr.mxu0 0.0
    %296 = vmatpush1.msra.mxu0 0.0
    %297 = vmatprep.subr.mxu0 0.0
    %298 = vmatpush1.msra.mxu0 0.0
    %299 = vmatprep.subr.mxu0 0.0
    %300 = vmatpush1.msra.mxu0 0.0
    %301 = vmatprep.subr.mxu0 0.0
    %302 = vmatpush1.msra.mxu0 0.0
    %303 = vmatprep.subr.mxu0 0.0
    %304 = vmatpush1.msra.mxu0 0.0
    %305 = vmatprep.subr.mxu0 0.0
    %306 = vmatpush1.msra.mxu0 0.0
    %307 = vmatprep.mubr.f32.mxu0 %v222
    %308 = vmatmul.mubr.f32.gmra.mrb[0].mxu0 %v30
    %v309 = vpop.f32.mrb[0].mxu0
    %v310 = vadd.f32 %v193, %v309
    %v311 = vpop.f32.mrb[0].mxu0
    %v312 = vadd.f32 %v197, %v311
    %313 = vdwg.mxu0
    %314 = vmatprep.subr.mxu0 %v35
    %315 = vmatpush1.msra.mxu0 %v34
    %316 = vmatprep.subr.mxu0 %v41
    %317 = vmatpush1.msra.mxu0 %v40
    %318 = vmatprep.subr.mxu0 %v47
    %319 = vmatpush1.msra.mxu0 %v46
    %320 = vmatprep.subr.mxu0 %v53
    %321 = vmatpush1.msra.mxu0 %v52
    %322 = vmatprep.subr.mxu0 %v59
    %323 = vmatpush1.msra.mxu0 %v58
    %324 = vmatprep.subr.mxu0 %v65
    %325 = vmatpush1.msra.mxu0 %v64
    %326 = vmatprep.subr.mxu0 %v71
    %327 = vmatpush1.msra.mxu0 %v70
    %328 = vmatprep.subr.mxu0 %v77
    %329 = vmatpush1.msra.mxu0 %v76
    %330 = vmatprep.subr.mxu0 %v83
    %331 = vmatpush1.msra.mxu0 %v82
    %332 = vmatprep.subr.mxu0 %v89
    %333 = vmatpush1.msra.mxu0 %v88
    %334 = vmatprep.subr.mxu0 %v95
    %335 = vmatpush1.msra.mxu0 %v94
    %336 = vmatprep.subr.mxu0 %v101
    %337 = vmatpush1.msra.mxu0 %v100
    %338 = vmatprep.subr.mxu0 %v107
    %339 = vmatpush1.msra.mxu0 %v106
    %340 = vmatprep.subr.mxu0 %v113
    %341 = vmatpush1.msra.mxu0 %v112
    %342 = vmatprep.subr.mxu0 %v119
    %343 = vmatpush1.msra.mxu0 %v118
    %344 = vmatprep.subr.mxu0 %v125
    %345 = vmatpush1.msra.mxu0 %v124
    %346 = vmatprep.subr.mxu0 %v131
    %347 = vmatpush1.msra.mxu0 %v130
    %348 = vmatprep.subr.mxu0 %v137
    %349 = vmatpush1.msra.mxu0 %v136
    %350 = vmatprep.subr.mxu0 %v143
    %351 = vmatpush1.msra.mxu0 %v142
    %352 = vmatprep.subr.mxu0 %v149
    %353 = vmatpush1.msra.mxu0 %v148
    %354 = vmatprep.subr.mxu0 %v155
    %355 = vmatpush1.msra.mxu0 %v154
    %356 = vmatprep.subr.mxu0 %v161
    %357 = vmatpush1.msra.mxu0 %v160
    %358 = vmatprep.subr.mxu0 %v167
    %359 = vmatpush1.msra.mxu0 %v166
    %360 = vmatprep.subr.mxu0 %v173
    %361 = vmatpush1.msra.mxu0 %v172
    %362 = vmatprep.subr.mxu0 %v179
    %363 = vmatpush1.msra.mxu0 %v178
    %364 = vmatprep.subr.mxu0 %v235
    %365 = vmatpush1.msra.mxu0 %v232
    %366 = vmatprep.subr.mxu0 0.0
    %367 = vmatpush1.msra.mxu0 0.0
    %368 = vmatprep.subr.mxu0 0.0
    %369 = vmatpush1.msra.mxu0 0.0
    %370 = vmatprep.subr.mxu0 0.0
    %371 = vmatpush1.msra.mxu0 0.0
    %372 = vmatprep.subr.mxu0 0.0
    %373 = vmatpush1.msra.mxu0 0.0
    %374 = vmatprep.subr.mxu0 0.0
    %375 = vmatpush1.msra.mxu0 0.0
    %376 = vmatprep.subr.mxu0 0.0
    %377 = vmatpush1.msra.mxu0 0.0
    %378 = vmatprep.mubr.f32.mxu0 %v222
    %379 = vmatmul.mubr.f32.gmra.mrb[0].mxu0 %v30
    %v380 = vpop.f32.mrb[0].mxu0
    %v381 = vadd.f32 %v201, %v380
    %v382 = vpop.f32.mrb[0].mxu0
    %v383 = vadd.f32 %v205, %v382
    %384 = vdwg.mxu0
    %385 = vmatprep.subr.mxu0 %v37
    %386 = vmatpush1.msra.mxu0 %v36
    %387 = vmatprep.subr.mxu0 %v43
    %388 = vmatpush1.msra.mxu0 %v42
    %389 = vmatprep.subr.mxu0 %v49
    %390 = vmatpush1.msra.mxu0 %v48
    %391 = vmatprep.subr.mxu0 %v55
    %392 = vmatpush1.msra.mxu0 %v54
    %393 = vmatprep.subr.mxu0 %v61
    %394 = vmatpush1.msra.mxu0 %v60
    %395 = vmatprep.subr.mxu0 %v67
    %396 = vmatpush1.msra.mxu0 %v66
    %397 = vmatprep.subr.mxu0 %v73
    %398 = vmatpush1.msra.mxu0 %v72
    %399 = vmatprep.subr.mxu0 %v79
    %400 = vmatpush1.msra.mxu0 %v78
    %401 = vmatprep.subr.mxu0 %v85
    %402 = vmatpush1.msra.mxu0 %v84
    %403 = vmatprep.subr.mxu0 %v91
    %404 = vmatpush1.msra.mxu0 %v90
    %405 = vmatprep.subr.mxu0 %v97
    %406 = vmatpush1.msra.mxu0 %v96
    %407 = vmatprep.subr.mxu0 %v103
    %408 = vmatpush1.msra.mxu0 %v102
    %409 = vmatprep.subr.mxu0 %v109
    %410 = vmatpush1.msra.mxu0 %v108
    %411 = vmatprep.subr.mxu0 %v115
    %412 = vmatpush1.msra.mxu0 %v114
    %413 = vmatprep.subr.mxu0 %v121
    %414 = vmatpush1.msra.mxu0 %v120
    %415 = vmatprep.subr.mxu0 %v127
    %416 = vmatpush1.msra.mxu0 %v126
    %417 = vmatprep.subr.mxu0 %v133
    %418 = vmatpush1.msra.mxu0 %v132
    %419 = vmatprep.subr.mxu0 %v139
    %420 = vmatpush1.msra.mxu0 %v138
    %421 = vmatprep.subr.mxu0 %v145
    %422 = vmatpush1.msra.mxu0 %v144
    %423 = vmatprep.subr.mxu0 %v151
    %424 = vmatpush1.msra.mxu0 %v150
    %425 = vmatprep.subr.mxu0 %v157
    %426 = vmatpush1.msra.mxu0 %v156
    %427 = vmatprep.subr.mxu0 %v163
    %428 = vmatpush1.msra.mxu0 %v162
    %429 = vmatprep.subr.mxu0 %v169
    %430 = vmatpush1.msra.mxu0 %v168
    %431 = vmatprep.subr.mxu0 %v175
    %432 = vmatpush1.msra.mxu0 %v174
    %433 = vmatprep.subr.mxu0 %v181
    %434 = vmatpush1.msra.mxu0 %v180
    %435 = vmatprep.subr.mxu0 %v241
    %436 = vmatpush1.msra.mxu0 %v238
    %437 = vmatprep.subr.mxu0 0.0
    %438 = vmatpush1.msra.mxu0 0.0
    %439 = vmatprep.subr.mxu0 0.0
    %440 = vmatpush1.msra.mxu0 0.0
    %441 = vmatprep.subr.mxu0 0.0
    %442 = vmatpush1.msra.mxu0 0.0
    %443 = vmatprep.subr.mxu0 0.0
    %444 = vmatpush1.msra.mxu0 0.0
    %445 = vmatprep.subr.mxu0 0.0
    %446 = vmatpush1.msra.mxu0 0.0
    %447 = vmatprep.subr.mxu0 0.0
    %448 = vmatpush1.msra.mxu0 0.0
    %449 = vmatprep.mubr.f32.mxu0 %v222
    %450 = vmatmul.mubr.f32.gmra.mrb[0].mxu0 %v30
    %v451 = vpop.f32.mrb[0].mxu0
    %v452 = vadd.f32 %v209, %v451
    %v453 = vpop.f32.mrb[0].mxu0
    %v454 = vadd.f32 %v213, %v453
    %455 = vdwg.mxu0
    %456 = vst [vmem:[%s3] sm:$0xff] %v310
    %457 = vst [vmem:[%s3 + $0x8] sm:$0xff] %v312
    %458 = vst [vmem:[%s3 + $0x10] sm:$0xff] %v381
    %459 = vst [vmem:[%s3 + $0x18] sm:$0xff] %v383
    %460 = vst [vmem:[%s3 + $0x20] sm:$0xff] %v452
    %vm461 = vcmask 785408
    %462 = vst.msk [vmem:[%s3 + $0x28] sm:$0xff] %vm461, %v454
    %464 = vrot.lane.b32.xlu0 %v454, 32
    %v465 = vpop.permute.xlu0 %464
    %vm467 = vcmask 187392
    %468 = vst.msk [vmem:[%s4] sm:$0xff] %vm467, %v465
    // Predicated region
    $region18: #{pose_discriminator_forward.1} parent=1 // pred_check
      _
    $region19: #{pose_discriminator_forward.1} parent=1 // pred_check_branch
      %470 = sbr.rel (0) target = $region21
    $region20: #{pose_discriminator_forward.1} parent=1 // pred_region
      _
    $region21: #{pose_discriminator_forward.1} parent=1 // pred_fallthru
      _
    // Predicated region
    $region22: #{pose_discriminator_forward.1} parent=1 // pred_check
      _
    $region23: #{pose_discriminator_forward.1} parent=1 // pred_check_branch
      %472 = sbr.rel (0) target = $region25
    $region24: #{pose_discriminator_forward.1} parent=1 // pred_region
      _
    $region25: #{pose_discriminator_forward.1} parent=1 // pred_fallthru
      _
    // Predicated region
    $region26: #{pose_discriminator_forward.1} parent=1 // pred_check
      _
    $region27: #{pose_discriminator_forward.1} parent=1 // pred_check_branch
      %474 = sbr.rel (0) target = $region29
    $region28: #{pose_discriminator_forward.1} parent=1 // pred_region
      _
    $region29: #{pose_discriminator_forward.1} parent=1 // pred_fallthru
      _
    // Predicated region
    $region30: #{pose_discriminator_forward.1} parent=1 // pred_check
      _
    $region31: #{pose_discriminator_forward.1} parent=1 // pred_check_branch
      %476 = sbr.rel (0) target = $region33
    $region32: #{pose_discriminator_forward.1} parent=1 // pred_region
      _
    $region33: #{pose_discriminator_forward.1} parent=1 // pred_fallthru
      _
    %477 = vsyncpa [#allocation3], 1

</llo_original>
